<compile_context>
chip_gen: v6e
topology: v6e:2x2x1
jax: 0.10.0
libtpu: 0.0.40
codegen_flags: <defaults>
</compile_context>

<pallas_src>
import functools

import jax
import jax.numpy as jnp
from jax import lax
from jax.experimental import pallas as pl
from jax.experimental.pallas import tpu as pltpu


def _decoder_block_kernel(xp_ref, w1_ref, b1_ref, w2_ref, b2_ref, o_ref,
                          *, NB, L, K, c_in, c_out):
    # xp_ref : (NB, C_in, L+2)   zero-padded input, native NCL, length on lanes
    # w1_ref : (K, C_in, C_in)   w1_k[t, co, ci] = torch_conv1d_w[co, ci, t]
    # b1_ref : (C_in, 1)
    # w2_ref : (2*C_out, C_in)   row t*C_out+co = torch_convT_w[:, co, t]
    # b2_ref : (C_out, 1)
    # o_ref  : (NB, C_out, 2L)   final layout, no wrapper transpose needed

    # ---- invariants hoisted out of the per-sample loop -----------------
    acc0 = jnp.broadcast_to(b1_ref[...], (c_in, L)).astype(jnp.float32)
    w2f = w2_ref[...]                                   # (2*C_out, C_in)
    b2 = b2_ref[...]                                    # (C_out, 1)

    # Even/odd "dilation" matrices: re[l, 2l] = 1, ro[l, 2l+1] = 1.  A matmul
    # with these places column l of the even/odd ConvT results at output
    # columns 2l / 2l+1, i.e. it performs the stride-2 interleave on the MXU
    # with no cross-lane shuffle.  Exact (each output lane has exactly one
    # nonzero term).  NOTE: O(L^2) — fine at these sizes; for large L tile the
    # length axis or switch to a strided store.
    row = lax.broadcasted_iota(jnp.int32, (L, 2 * L), 0)
    col = lax.broadcasted_iota(jnp.int32, (L, 2 * L), 1)
    re = (col == 2 * row).astype(jnp.float32)
    ro = (col == 2 * row + 1).astype(jnp.float32)

    for nb in range(NB):                                # static, NB is small
        xp = xp_ref[nb]                                 # (C_in, L+2)

        # --- Conv1d(C_in, C_in, K, padding=1): K tap matmuls, L on lanes ---
        acc = acc0                                      # bias-initialized
        for t in range(K):                              # static unrolled taps
            acc = acc + jnp.dot(w1_ref[t], xp[:, t:t + L],
                                preferred_element_type=jnp.float32)
        h = jnp.tanh(acc)                               # (C_in, L)

        # --- ConvTranspose1d(C_in, C_out, 2, stride=2): one fused matmul ---
        z = jnp.dot(w2f, h, preferred_element_type=jnp.float32)  # (2*C_out, L)
        # interleave even (t=0) / odd (t=1) taps along the length(lane) axis
        y = (jnp.dot(z[:c_out], re, preferred_element_type=jnp.float32) +
             jnp.dot(z[c_out:], ro, preferred_element_type=jnp.float32))
        o_ref[nb] = jnp.tanh(y + b2)                    # (C_out, 2L)


def decoder_block(x, w1, b1, w2, b2, *, kernel_size, num_blocks=None):
    """x: (N, C_in, L) float32 (PyTorch NCL). Returns (N, C_out, 2L)."""
    N, c_in, L = x.shape
    c_out = w2.shape[1]
    K = kernel_size
    assert L + 2 - K + 1 == L, "padding=1 keeps length only for kernel_size=3"

    # Zero-pad the length axis only (Conv1d padding=1).  No layout transposes.
    xp = jnp.pad(x, ((0, 0), (0, 0), (1, 1))).astype(jnp.float32)  # (N,C_in,L+2)

    # Re-layout weights for channels-on-sublane / length-on-lane matmuls.
    w1_k = jnp.transpose(w1, (2, 0, 1)).astype(jnp.float32)   # (K, C_in, C_in)
    b1_k = b1.reshape(c_in, 1).astype(jnp.float32)
    # Fuse both ConvTranspose taps into one weight: rows [even(C_out); odd(C_out)].
    w2_k = jnp.transpose(w2, (2, 1, 0)).reshape(2 * c_out, c_in).astype(jnp.float32)
    b2_k = b2.reshape(c_out, 1).astype(jnp.float32)

    # Grid: at most 2 "parallel" blocks over the batch (keeps both v7x
    # TensorCores busy); each block processes NB samples so per-step pipeline
    # overhead is amortized.  On v5e/v6e pass num_blocks=1 for a single fat step.
    if num_blocks is None:
        num_blocks = 2 if (N >= 2 and N % 2 == 0) else 1
    assert N % num_blocks == 0
    NB = N // num_blocks

    kernel = functools.partial(_decoder_block_kernel,
                               NB=NB, L=L, K=K, c_in=c_in, c_out=c_out)

    out = pl.pallas_call(
        kernel,
        out_shape=jax.ShapeDtypeStruct((N, c_out, 2 * L), jnp.float32),
        grid_spec=pltpu.PrefetchScalarGridSpec(
            num_scalar_prefetch=0,
            grid=(num_blocks,),
            in_specs=[
                pl.BlockSpec((NB, c_in, L + 2), lambda g: (g, 0, 0)),
                # Weights/biases: constant index maps.  At production channel
                # widths, mark these single-buffered or stage them in scratch
                # to avoid 2x VMEM residency; irrelevant at C=4/8.
                pl.BlockSpec((K, c_in, c_in), lambda g: (0, 0, 0)),
                pl.BlockSpec((c_in, 1), lambda g: (0, 0)),
                pl.BlockSpec((2 * c_out, c_in), lambda g: (0, 0)),
                pl.BlockSpec((c_out, 1), lambda g: (0, 0)),
            ],
            out_specs=pl.BlockSpec((NB, c_out, 2 * L), lambda g: (g, 0, 0)),
        ),
        compiler_params=pltpu.CompilerParams(
            dimension_semantics=("parallel",)),
    )(xp, w1_k, b1_k, w2_k, b2_k)

    # Already (N, C_out, 2L) in the PyTorch layout — nothing left to do.
    return out


def decoder_block_ref(x, w1, b1, w2, b2, *, kernel_size):
    """Plain-JAX reference with PyTorch semantics (NCL)."""
    N, c_in, L = x.shape
    K = kernel_size
    xp = jnp.pad(x, ((0, 0), (0, 0), (1, 1)))                  # (N, C_in, L+2)
    taps = jnp.stack([xp[:, :, t:t + L] for t in range(K)], axis=-1)  # (N,Ci,L,K)
    y = jnp.einsum("nclk,ock->nol", taps, w1) + b1[None, :, None]
    h = jnp.tanh(y)                                            # (N, C_in, L)
    z = jnp.einsum("ncl,cot->nolt", h, w2)                     # (N, C_out, L, 2)
    c_out = w2.shape[1]
    z = z.reshape(N, c_out, 2 * L) + b2[None, :, None]
    return jnp.tanh(z)


if __name__ == "__main__":
    # Small shapes consistent with the module: DecoderBlock(4, 8, 3) on (2, 4, 16).
    N, C_IN, C_OUT, L, K = 2, 4, 8, 16, 3

    key = jax.random.PRNGKey(0)
    kx, k1, k2, k3, k4 = jax.random.split(key, 5)
    x = jax.random.normal(kx, (N, C_IN, L), dtype=jnp.float32)

    # Deterministic parameters (torch layouts):
    #   Conv1d weight          : (C_in, C_in, K)
    #   ConvTranspose1d weight : (C_in, C_out, 2)
    w1 = 0.3 * jax.random.normal(k1, (C_IN, C_IN, K), dtype=jnp.float32)
    b1 = 0.1 * jax.random.normal(k2, (C_IN,), dtype=jnp.float32)
    w2 = 0.3 * jax.random.normal(k3, (C_IN, C_OUT, 2), dtype=jnp.float32)
    b2 = 0.1 * jax.random.normal(k4, (C_OUT,), dtype=jnp.float32)

    out = decoder_block(x, w1, b1, w2, b2, kernel_size=K)
    out = jax.block_until_ready(out)

    ref = decoder_block_ref(x, w1, b1, w2, b2, kernel_size=K)
    assert out.shape == (N, C_OUT, 2 * L), out.shape
    assert jnp.allclose(out, ref, atol=1e-5, rtol=1e-5), (
        float(jnp.max(jnp.abs(out - ref))))
    print("KERNEL_OK")
</pallas_src>

<mosaic_0001>
module attributes {stable_mosaic.version = 11 : i64} {
  func.func @_decoder_block_kernel(%arg0: i32, %arg1: memref<1x4x18xf32, #tpu.memory_space<vmem>>, %arg2: memref<3x4x4xf32, #tpu.memory_space<vmem>>, %arg3: memref<4x1xf32, #tpu.memory_space<vmem>>, %arg4: memref<16x4xf32, #tpu.memory_space<vmem>>, %arg5: memref<8x1xf32, #tpu.memory_space<vmem>>, %arg6: memref<1x8x32xf32, #tpu.memory_space<vmem>>) attributes {dimension_semantics = [#tpu.dimension_semantics<parallel>], iteration_bounds = array<i64: 2>, scalar_prefetch = 0 : i64, scratch_operands = 0 : i64, tpu.core_type = #tpu.core_type<tc>, window_params = [{transform_indices = @transform_0, window_bounds = array<i64: 1, 4, 18>}, {pipeline_mode = #tpu.pipeline_mode<synchronous>, transform_indices = @transform_1, window_bounds = array<i64: 3, 4, 4>}, {pipeline_mode = #tpu.pipeline_mode<synchronous>, transform_indices = @transform_2, window_bounds = array<i64: 4, 1>}, {pipeline_mode = #tpu.pipeline_mode<synchronous>, transform_indices = @transform_3, window_bounds = array<i64: 16, 4>}, {pipeline_mode = #tpu.pipeline_mode<synchronous>, transform_indices = @transform_4, window_bounds = array<i64: 8, 1>}, {transform_indices = @transform_5, window_bounds = array<i64: 1, 8, 32>}]} {
    %c0 = arith.constant 0 : index
    %c0_0 = arith.constant 0 : index
    %0 = vector.load %arg3[%c0, %c0_0] : memref<4x1xf32, #tpu.memory_space<vmem>>, vector<4x1xf32>
    %1 = vector.shape_cast %0 : vector<4x1xf32> to vector<4x1xf32>
    %2 = vector.broadcast %1 : vector<4x1xf32> to vector<4x16xf32>
    %c0_1 = arith.constant 0 : index
    %c0_2 = arith.constant 0 : index
    %3 = vector.load %arg4[%c0_1, %c0_2] : memref<16x4xf32, #tpu.memory_space<vmem>>, vector<16x4xf32>
    %c0_3 = arith.constant 0 : index
    %c0_4 = arith.constant 0 : index
    %4 = vector.load %arg5[%c0_3, %c0_4] : memref<8x1xf32, #tpu.memory_space<vmem>>, vector<8x1xf32>
    %5 = tpu.iota {dimensions = array<i32: 0>} : vector<16x32xi32>
    %6 = tpu.iota {dimensions = array<i32: 1>} : vector<16x32xi32>
    %c2_i32 = arith.constant 2 : i32
    %7 = vector.broadcast %c2_i32 : i32 to vector<16x32xi32>
    %8 = arith.muli %7, %5 : vector<16x32xi32>
    %9 = arith.cmpi eq, %6, %8 : vector<16x32xi32>
    %10 = arith.extui %9 : vector<16x32xi1> to vector<16x32xi32>
    %11 = arith.sitofp %10 : vector<16x32xi32> to vector<16x32xf32>
    %c2_i32_5 = arith.constant 2 : i32
    %12 = vector.broadcast %c2_i32_5 : i32 to vector<16x32xi32>
    %13 = arith.muli %12, %5 : vector<16x32xi32>
    %c1_i32 = arith.constant 1 : i32
    %14 = vector.broadcast %c1_i32 : i32 to vector<16x32xi32>
    %15 = arith.addi %13, %14 : vector<16x32xi32>
    %16 = arith.cmpi eq, %6, %15 : vector<16x32xi32>
    %17 = arith.extui %16 : vector<16x32xi1> to vector<16x32xi32>
    %18 = arith.sitofp %17 : vector<16x32xi32> to vector<16x32xf32>
    %c0_6 = arith.constant 0 : index
    %c0_7 = arith.constant 0 : index
    %c0_8 = arith.constant 0 : index
    %19 = vector.load %arg1[%c0_6, %c0_7, %c0_8] : memref<1x4x18xf32, #tpu.memory_space<vmem>>, vector<1x4x18xf32>
    %20 = vector.shape_cast %19 : vector<1x4x18xf32> to vector<4x18xf32>
    %c0_9 = arith.constant 0 : index
    %c0_10 = arith.constant 0 : index
    %c0_11 = arith.constant 0 : index
    %21 = vector.load %arg2[%c0_9, %c0_10, %c0_11] : memref<3x4x4xf32, #tpu.memory_space<vmem>>, vector<1x4x4xf32>
    %22 = vector.shape_cast %21 : vector<1x4x4xf32> to vector<4x4xf32>
    %23 = vector.extract_strided_slice %20 {offsets = [0, 0], sizes = [4, 16], strides = [1, 1]} : vector<4x18xf32> to vector<4x16xf32>
    %cst = arith.constant dense<0.000000e+00> : vector<4x16xf32>
    %24 = tpu.matmul %22, %23, %cst {dimension_numbers = #tpu.dot_dimension_numbers<[1], [0], [0], [1], [0, 0, 1, 1], [], []>} : vector<4x4xf32>, vector<4x16xf32>, vector<4x16xf32> -> vector<4x16xf32>
    %25 = arith.addf %2, %24 : vector<4x16xf32>
    %c1 = arith.constant 1 : index
    %c0_12 = arith.constant 0 : index
    %c0_13 = arith.constant 0 : index
    %26 = vector.load %arg2[%c1, %c0_12, %c0_13] : memref<3x4x4xf32, #tpu.memory_space<vmem>>, vector<1x4x4xf32>
    %27 = vector.shape_cast %26 : vector<1x4x4xf32> to vector<4x4xf32>
    %28 = vector.extract_strided_slice %20 {offsets = [0, 1], sizes = [4, 16], strides = [1, 1]} : vector<4x18xf32> to vector<4x16xf32>
    %cst_14 = arith.constant dense<0.000000e+00> : vector<4x16xf32>
    %29 = tpu.matmul %27, %28, %cst_14 {dimension_numbers = #tpu.dot_dimension_numbers<[1], [0], [0], [1], [0, 0, 1, 1], [], []>} : vector<4x4xf32>, vector<4x16xf32>, vector<4x16xf32> -> vector<4x16xf32>
    %30 = arith.addf %25, %29 : vector<4x16xf32>
    %c2 = arith.constant 2 : index
    %c0_15 = arith.constant 0 : index
    %c0_16 = arith.constant 0 : index
    %31 = vector.load %arg2[%c2, %c0_15, %c0_16] : memref<3x4x4xf32, #tpu.memory_space<vmem>>, vector<1x4x4xf32>
    %32 = vector.shape_cast %31 : vector<1x4x4xf32> to vector<4x4xf32>
    %33 = vector.extract_strided_slice %20 {offsets = [0, 2], sizes = [4, 16], strides = [1, 1]} : vector<4x18xf32> to vector<4x16xf32>
    %cst_17 = arith.constant dense<0.000000e+00> : vector<4x16xf32>
    %34 = tpu.matmul %32, %33, %cst_17 {dimension_numbers = #tpu.dot_dimension_numbers<[1], [0], [0], [1], [0, 0, 1, 1], [], []>} : vector<4x4xf32>, vector<4x16xf32>, vector<4x16xf32> -> vector<4x16xf32>
    %35 = arith.addf %30, %34 : vector<4x16xf32>
    %36 = math.tanh %35 : vector<4x16xf32>
    %cst_18 = arith.constant dense<0.000000e+00> : vector<16x16xf32>
    %37 = tpu.matmul %3, %36, %cst_18 {dimension_numbers = #tpu.dot_dimension_numbers<[1], [0], [0], [1], [0, 0, 1, 1], [], []>} : vector<16x4xf32>, vector<4x16xf32>, vector<16x16xf32> -> vector<16x16xf32>
    %38 = vector.extract_strided_slice %37 {offsets = [0, 0], sizes = [8, 16], strides = [1, 1]} : vector<16x16xf32> to vector<8x16xf32>
    %cst_19 = arith.constant dense<0.000000e+00> : vector<8x32xf32>
    %39 = tpu.matmul %38, %11, %cst_19 {dimension_numbers = #tpu.dot_dimension_numbers<[1], [0], [0], [1], [0, 0, 1, 1], [], []>} : vector<8x16xf32>, vector<16x32xf32>, vector<8x32xf32> -> vector<8x32xf32>
    %40 = vector.extract_strided_slice %37 {offsets = [8, 0], sizes = [8, 16], strides = [1, 1]} : vector<16x16xf32> to vector<8x16xf32>
    %cst_20 = arith.constant dense<0.000000e+00> : vector<8x32xf32>
    %41 = tpu.matmul %40, %18, %cst_20 {dimension_numbers = #tpu.dot_dimension_numbers<[1], [0], [0], [1], [0, 0, 1, 1], [], []>} : vector<8x16xf32>, vector<16x32xf32>, vector<8x32xf32> -> vector<8x32xf32>
    %42 = arith.addf %39, %41 : vector<8x32xf32>
    %43 = vector.broadcast %4 : vector<8x1xf32> to vector<8x32xf32>
    %44 = arith.addf %42, %43 : vector<8x32xf32>
    %45 = math.tanh %44 : vector<8x32xf32>
    %c0_21 = arith.constant 0 : index
    %c0_22 = arith.constant 0 : index
    %c0_23 = arith.constant 0 : index
    %46 = vector.load %arg6[%c0_21, %c0_22, %c0_23] : memref<1x8x32xf32, #tpu.memory_space<vmem>>, vector<1x8x32xf32>
    %47 = vector.shape_cast %46 : vector<1x8x32xf32> to vector<8x32xf32>
    %48 = vector.shape_cast %45 : vector<8x32xf32> to vector<1x8x32xf32>
    tpu.vector_store %arg6[%c0_21, %c0_22, %c0_23], %48 {strides = array<i32>} : memref<1x8x32xf32, #tpu.memory_space<vmem>>, vector<1x8x32xf32>,
    return
  }
  func.func @transform_0(%arg0: i32) -> (i32, i32, i32) {
    %c0_i32 = arith.constant 0 : i32
    %c0_i32_0 = arith.constant 0 : i32
    %c0_i32_1 = arith.constant 0 : i32
    return %arg0, %c0_i32, %c0_i32_0 : i32, i32, i32
  }
  func.func @transform_1(%arg0: i32) -> (i32, i32, i32) {
    %c0_i32 = arith.constant 0 : i32
    %c0_i32_0 = arith.constant 0 : i32
    %c0_i32_1 = arith.constant 0 : i32
    %c0_i32_2 = arith.constant 0 : i32
    return %c0_i32, %c0_i32_0, %c0_i32_1 : i32, i32, i32
  }
  func.func @transform_2(%arg0: i32) -> (i32, i32) {
    %c0_i32 = arith.constant 0 : i32
    %c0_i32_0 = arith.constant 0 : i32
    %c0_i32_1 = arith.constant 0 : i32
    return %c0_i32, %c0_i32_0 : i32, i32
  }
  func.func @transform_3(%arg0: i32) -> (i32, i32) {
    %c0_i32 = arith.constant 0 : i32
    %c0_i32_0 = arith.constant 0 : i32
    %c0_i32_1 = arith.constant 0 : i32
    return %c0_i32, %c0_i32_0 : i32, i32
  }
  func.func @transform_4(%arg0: i32) -> (i32, i32) {
    %c0_i32 = arith.constant 0 : i32
    %c0_i32_0 = arith.constant 0 : i32
    %c0_i32_1 = arith.constant 0 : i32
    return %c0_i32, %c0_i32_0 : i32, i32
  }
  func.func @transform_5(%arg0: i32) -> (i32, i32, i32) {
    %c0_i32 = arith.constant 0 : i32
    %c0_i32_0 = arith.constant 0 : i32
    %c0_i32_1 = arith.constant 0 : i32
    return %arg0, %c0_i32, %c0_i32_0 : i32, i32, i32
  }
}

</mosaic_0001>

<llo_original>
// kernel: tpu_custom_call.1
$region0: #{tpu_custom_call.1}
  #allocation0 [shape = 'u32[]', space=smem, size = 0x4, offset = 0x4, fixed_abs, tag = 'smem constant byte address 0x4 - core index']
  #allocation1 [shape = 'u32[144,128]{1,0:T(1,128)}', space=vmem, size = 0x12000, scoped, tag = 'internal scratch']
  %s0 = inlined_call_operand.vmem [shape: f32[2,4,18], index: 0, kind: input, shape index: {}]
  %s1 = inlined_call_operand.vmem [shape: f32[3,4,4], index: 1, kind: input, shape index: {}]
  %s2 = inlined_call_operand.vmem [shape: f32[4,1], index: 2, kind: input, shape index: {}]
  %s3 = inlined_call_operand.vmem [shape: f32[16,4], index: 3, kind: input, shape index: {}]
  %s4 = inlined_call_operand.vmem [shape: f32[8,1], index: 4, kind: input, shape index: {}]
  %s5 = inlined_call_operand.hbm [shape: f32[2,8,32], index: 5, kind: output, shape index: {}]
  %s6 = sld [smem:[#allocation0]]
  $region53: #{tpu_custom_call.1} parent=0
    _
  %s8 = ssub.s32 1, %s6
  %s9 = scalar_select 0, %s8, %s6
  $region1: #{tpu_custom_call.1} parent=0
    #allocation2 [shape = 'u8[8192]{0}', space=vmem, size = 0x2000, scoped, tag = 'output window, operand 0']
    #allocation3 [shape = 's32[2]{0}', space=sflag, size = 0x8, scoped, tag = 'scoped memory for tpu_custom_call.1']
    %10 = vsyncpa [#allocation3], 0
    %s11 = scalar_lea.sflag [#allocation3], 1
    %12 = vsyncpa %s11, 0
    loop: start=0, step=1, limit=4
    $region2: #{tpu_custom_call.1} parent=1 // loop_pre_header
      _
    $region3: #{tpu_custom_call.1} parent=1 // loop_header
      %s14 = sphi 0, %s18
      %p15 = scmp.ge.s32.totalorder %s14, 4
      %s24 = sphi 0, %s26
      %s27 = sphi 0, %s24
      %s28 = sphi 0, %s27
      %s44 = sphi 0, %s28
      %s48 = sphi 0, %s48
      %s50 = sphi 0, %s48
      %s51 = sphi 0, %s50
      %s65 = sphi 0, %s51
      %s69 = sphi 0, %s69
      %s71 = sphi 0, %s69
      %s72 = sphi 0, %s71
      %s86 = sphi 0, %s72
      %s90 = sphi 0, %s90
      %s92 = sphi 0, %s90
      %s93 = sphi 0, %s92
      %s107 = sphi 0, %s93
      %s111 = sphi 0, %s111
      %s113 = sphi 0, %s111
      %s114 = sphi 0, %s113
      %s128 = sphi 0, %s114
      %s134 = sphi 0, %s136
      %s137 = sphi 0, %s134
      %s138 = sphi 0, %s137
      %s154 = sphi 0, %s138
    $region4: #{tpu_custom_call.1} parent=1 // loop_header_branch
      %17 = sbr.rel (%p15) target = $region8
    $region5: #{tpu_custom_call.1} parent=1 // loop_body
      %s19 = ssub.s32 %s14, 1
      %s20 = ssub.s32 %s14, 2
      %s21 = sadd.s32 %s14, 1
      %s22 = ssub.s32 %s14, %s21
      %p23 = scmp.eq.s32.totalorder %s22, 0
      %s25 = sadd.s32 %s24, 1
      %s26 = scalar_select %p23, %s24, %s25
      %p29 = pneg %p23
      %p30 = scmp.eq.s32.totalorder %s14, 1
      %p31 = por %p29, %p30
      %p32 = scmp.ne.s32.totalorder %s24, %s27
      %p33 = scmp.eq.s32.totalorder %s14, 0
      %p34 = por %p32, %p33
      %p35 = scmp.ne.s32.totalorder %s24, %s27
      %p36 = scmp.eq.s32.totalorder %s19, 1
      %p37 = por %p35, %p36
      %p38 = scmp.ne.s32.totalorder %s27, %s28
      %p39 = scmp.eq.s32.totalorder %s19, 0
      %p40 = por %p38, %p39
      %p41 = scmp.ne.s32.totalorder %s27, %s28
      %p42 = scmp.eq.s32.totalorder %s20, 1
      %p43 = por %p41, %p42
      %p45 = scmp.ne.s32.totalorder %s28, %s44
      %p46 = scmp.eq.s32.totalorder %s20, 0
      %p47 = por %p45, %p46
      %s49 = sadd.s32 %s48, 1
      %p52 = scmp.eq.s32.totalorder %s14, 1
      %p53 = scmp.ne.s32.totalorder %s48, %s50
      %p54 = scmp.eq.s32.totalorder %s14, 0
      %p55 = por %p53, %p54
      %p56 = scmp.ne.s32.totalorder %s48, %s50
      %p57 = scmp.eq.s32.totalorder %s19, 1
      %p58 = por %p56, %p57
      %p59 = scmp.ne.s32.totalorder %s50, %s51
      %p60 = scmp.eq.s32.totalorder %s19, 0
      %p61 = por %p59, %p60
      %p62 = scmp.ne.s32.totalorder %s50, %s51
      %p63 = scmp.eq.s32.totalorder %s20, 1
      %p64 = por %p62, %p63
      %p66 = scmp.ne.s32.totalorder %s51, %s65
      %p67 = scmp.eq.s32.totalorder %s20, 0
      %p68 = por %p66, %p67
      %s70 = sadd.s32 %s69, 1
      %p73 = scmp.eq.s32.totalorder %s14, 1
      %p74 = scmp.ne.s32.totalorder %s69, %s71
      %p75 = scmp.eq.s32.totalorder %s14, 0
      %p76 = por %p74, %p75
      %p77 = scmp.ne.s32.totalorder %s69, %s71
      %p78 = scmp.eq.s32.totalorder %s19, 1
      %p79 = por %p77, %p78
      %p80 = scmp.ne.s32.totalorder %s71, %s72
      %p81 = scmp.eq.s32.totalorder %s19, 0
      %p82 = por %p80, %p81
      %p83 = scmp.ne.s32.totalorder %s71, %s72
      %p84 = scmp.eq.s32.totalorder %s20, 1
      %p85 = por %p83, %p84
      %p87 = scmp.ne.s32.totalorder %s72, %s86
      %p88 = scmp.eq.s32.totalorder %s20, 0
      %p89 = por %p87, %p88
      %s91 = sadd.s32 %s90, 1
      %p94 = scmp.eq.s32.totalorder %s14, 1
      %p95 = scmp.ne.s32.totalorder %s90, %s92
      %p96 = scmp.eq.s32.totalorder %s14, 0
      %p97 = por %p95, %p96
      %p98 = scmp.ne.s32.totalorder %s90, %s92
      %p99 = scmp.eq.s32.totalorder %s19, 1
      %p100 = por %p98, %p99
      %p101 = scmp.ne.s32.totalorder %s92, %s93
      %p102 = scmp.eq.s32.totalorder %s19, 0
      %p103 = por %p101, %p102
      %p104 = scmp.ne.s32.totalorder %s92, %s93
      %p105 = scmp.eq.s32.totalorder %s20, 1
      %p106 = por %p104, %p105
      %p108 = scmp.ne.s32.totalorder %s93, %s107
      %p109 = scmp.eq.s32.totalorder %s20, 0
      %p110 = por %p108, %p109
      %s112 = sadd.s32 %s111, 1
      %p115 = scmp.eq.s32.totalorder %s14, 1
      %p116 = scmp.ne.s32.totalorder %s111, %s113
      %p117 = scmp.eq.s32.totalorder %s14, 0
      %p118 = por %p116, %p117
      %p119 = scmp.ne.s32.totalorder %s111, %s113
      %p120 = scmp.eq.s32.totalorder %s19, 1
      %p121 = por %p119, %p120
      %p122 = scmp.ne.s32.totalorder %s113, %s114
      %p123 = scmp.eq.s32.totalorder %s19, 0
      %p124 = por %p122, %p123
      %p125 = scmp.ne.s32.totalorder %s113, %s114
      %p126 = scmp.eq.s32.totalorder %s20, 1
      %p127 = por %p125, %p126
      %p129 = scmp.ne.s32.totalorder %s114, %s128
      %p130 = scmp.eq.s32.totalorder %s20, 0
      %p131 = por %p129, %p130
      %s132 = ssub.s32 %s14, %s21
      %p133 = scmp.eq.s32.totalorder %s132, 0
      %s135 = sadd.s32 %s134, 1
      %s136 = scalar_select %p133, %s134, %s135
      %p139 = pneg %p133
      %p140 = scmp.eq.s32.totalorder %s14, 1
      %p141 = por %p139, %p140
      %p142 = scmp.ne.s32.totalorder %s134, %s137
      %p143 = scmp.eq.s32.totalorder %s14, 0
      %p144 = por %p142, %p143
      %p145 = scmp.ne.s32.totalorder %s134, %s137
      %p146 = scmp.eq.s32.totalorder %s19, 1
      %p147 = por %p145, %p146
      %p148 = scmp.ne.s32.totalorder %s137, %s138
      %p149 = scmp.eq.s32.totalorder %s19, 0
      %p150 = por %p148, %p149
      %p151 = scmp.ne.s32.totalorder %s137, %s138
      %p152 = scmp.eq.s32.totalorder %s20, 1
      %p153 = por %p151, %p152
      %p155 = scmp.ne.s32.totalorder %s138, %s154
      %p156 = scmp.eq.s32.totalorder %s20, 0
      %p157 = por %p155, %p156
      %p158 = scmp.le.s32.totalorder 1, %s14
      %p159 = scmp.lt.s32.totalorder %s14, 3
      %p160 = pnand %p158, %p159
      %p161 = pneg %p160
      // Predicated region
      $region9: #{tpu_custom_call.1} parent=5 // pred_check
        _
      $region10: #{tpu_custom_call.1} parent=5 // pred_check_branch
        %163 = sbr.rel (%p160) target = $region12
      $region11: #{tpu_custom_call.1} parent=5 // pred_region
        %s164 = ssub.s32 %s14, 1
        // Predicated region
        $region13: #{tpu_custom_call.1} parent=11 // pred_check
          %p165 = pneg %p61
        $region14: #{tpu_custom_call.1} parent=11 // pred_check_branch
          %167 = sbr.rel (%p165) target = $region16
        $region15: #{tpu_custom_call.1} parent=11 // pred_region
          _
        $region16: #{tpu_custom_call.1} parent=11 // pred_fallthru
          _
        // Predicated region
        $region17: #{tpu_custom_call.1} parent=11 // pred_check
          %p168 = pneg %p82
        $region18: #{tpu_custom_call.1} parent=11 // pred_check_branch
          %170 = sbr.rel (%p168) target = $region20
        $region19: #{tpu_custom_call.1} parent=11 // pred_region
          _
        $region20: #{tpu_custom_call.1} parent=11 // pred_fallthru
          _
        // Predicated region
        $region21: #{tpu_custom_call.1} parent=11 // pred_check
          %p171 = pneg %p103
        $region22: #{tpu_custom_call.1} parent=11 // pred_check_branch
          %173 = sbr.rel (%p171) target = $region24
        $region23: #{tpu_custom_call.1} parent=11 // pred_region
          _
        $region24: #{tpu_custom_call.1} parent=11 // pred_fallthru
          _
        // Predicated region
        $region25: #{tpu_custom_call.1} parent=11 // pred_check
          %p174 = pneg %p124
        $region26: #{tpu_custom_call.1} parent=11 // pred_check_branch
          %176 = sbr.rel (%p174) target = $region28
        $region27: #{tpu_custom_call.1} parent=11 // pred_region
          _
        $region28: #{tpu_custom_call.1} parent=11 // pred_fallthru
          _
      $region12: #{tpu_custom_call.1} parent=5 // pred_fallthru
        _
      %p177 = scmp.lt.s32.totalorder %s14, 2
      // Predicated region
      $region29: #{tpu_custom_call.1} parent=5 // pred_check
        %p178 = pneg %p177
      $region30: #{tpu_custom_call.1} parent=5 // pred_check_branch
        %180 = sbr.rel (%p178) target = $region32
      $region31: #{tpu_custom_call.1} parent=5 // pred_region
        // Predicated region
        $region33: #{tpu_custom_call.1} parent=31 // pred_check
          %p181 = pneg %p34
        $region34: #{tpu_custom_call.1} parent=31 // pred_check_branch
          %183 = sbr.rel (%p181) target = $region36
        $region35: #{tpu_custom_call.1} parent=31 // pred_region
          %p184 = scmp.lt.s32.totalorder %s14, 1
          %s185 = scalar_select %p184, %s14, 1
          %s186 = smul.addr %s185, 4
          %s187 = scalar_lea.vmem %s0, %s186
        $region36: #{tpu_custom_call.1} parent=31 // pred_fallthru
          _
      $region32: #{tpu_custom_call.1} parent=5 // pred_fallthru
        _
      %p188 = scmp.le.s32.totalorder 1, %s14
      %p189 = scmp.lt.s32.totalorder %s14, 3
      %p190 = pnand %p188, %p189
      %p191 = pneg %p190
      // Predicated region
      $region37: #{tpu_custom_call.1} parent=5 // pred_check
        _
      $region38: #{tpu_custom_call.1} parent=5 // pred_check_branch
        %193 = sbr.rel (%p190) target = $region40
      $region39: #{tpu_custom_call.1} parent=5 // pred_region
        %s194 = ssub.s32 %s14, 1
        %p195 = scmp.lt.s32.totalorder %s19, 1
        %s196 = scalar_select %p195, %s19, 1
        %s197 = smul.addr %s196, 4
        %s198 = scalar_lea.vmem %s0, %s197
        %p199 = pneg %p40
        %p200 = pneg %p37
        %p201 = pneg %p61
        %p202 = pneg %p58
        %p203 = pneg %p82
        %p204 = pneg %p79
        %p205 = pneg %p103
        %p206 = pneg %p100
        %p207 = pneg %p124
        %p208 = pneg %p121
        %p209 = pneg %p150
        %p210 = pneg %p147
        %s211 = sand.u32 %s137, 1
        %s212 = scalar_lea.sflag [#allocation3], %s211
        %s213 = sand.u32 %s137, 1
        %s214 = smul.addr %s213, 8
        %s215 = scalar_lea.vmem [#allocation2], %s214
        %p216 = scmp.lt.s32.totalorder %s19, 1
        %s217 = scalar_select %p216, %s19, 1
        %s218 = smul.addr %s217, 4
        %s219 = scalar_lea.vmem %s0, %s218
        %v220 = vld [vmem:[%s2] sm:$0xf]
        %222 = vset.pattern.permute.xlu0 0
        %223 = vperm.xlu0 %222, %v220
        %v224 = vpop.permute.xlu0 %223
        %v226 = vld [vmem:[%s3] sm:$0xff]
        %v227 = vld [vmem:[%s3 + $0x8] sm:$0xff]
        %v228 = vld [vmem:[%s4] sm:$0xff]
        %v229 = vlaneseq
        %v230 = vshrl.u32 %v229, 7
        %v231 = vadd.s32 %v230, 8
        %v232 = vlaneseq
        %v233 = vand.u32 %v232, 127
        %v234 = vmul.u32 %v230, 2
        %v235 = vmul.u32 %v231, 2
        %vm236 = vcmp.eq.s32.totalorder %v233, %v234
        %vm237 = vcmp.eq.s32.totalorder %v233, %v235
        %v238 = vsel %vm236, 1, 0
        %v239 = vsel %vm237, 1, 0
        %v240 = vcvt.s32.f32 %v238
        %v241 = vcvt.s32.f32 %v239
        %v242 = vadd.s32 %v234, 1
        %v243 = vadd.s32 %v235, 1
        %vm244 = vcmp.eq.s32.totalorder %v233, %v242
        %vm245 = vcmp.eq.s32.totalorder %v233, %v243
        %v246 = vsel %vm244, 1, 0
        %v247 = vsel %vm245, 1, 0
        %v248 = vcvt.s32.f32 %v246
        %v249 = vcvt.s32.f32 %v247
        %v250 = vld [vmem:[%s219] sm:$0xf]
        %v251 = vld [vmem:[%s1] sm:$0xf]
        %vm252 = vcmask 31744
        %v254 = vsel %vm252, %v251, 0
        %vm256 = vcmask 1043456
        %v258 = vsel %vm256, %v250, 0
        %260 = vmatprep.subr.mxu0 0.0
        %261 = vmatpush1.msra.mxu0 0.0
        %262 = vmatprep.subr.mxu0 0.0
        %263 = vmatpush1.msra.mxu0 0.0
        %264 = vmatprep.subr.mxu0 0.0
        %265 = vmatpush1.msra.mxu0 0.0
        %266 = vmatprep.subr.mxu0 0.0
        %267 = vmatpush1.msra.mxu0 0.0
        %268 = vmatprep.subr.mxu0 0.0
        %269 = vmatpush1.msra.mxu0 0.0
        %270 = vmatprep.subr.mxu0 0.0
        %271 = vmatpush1.msra.mxu0 0.0
        %272 = vmatprep.subr.mxu0 0.0
        %273 = vmatpush1.msra.mxu0 0.0
        %274 = vmatprep.subr.mxu0 0.0
        %275 = vmatpush1.msra.mxu0 0.0
        %276 = vmatprep.subr.mxu0 0.0
        %277 = vmatpush1.msra.mxu0 0.0
        %278 = vmatprep.subr.mxu0 0.0
        %279 = vmatpush1.msra.mxu0 0.0
        %280 = vmatprep.subr.mxu0 0.0
        %281 = vmatpush1.msra.mxu0 0.0
        %282 = vmatprep.subr.mxu0 0.0
        %283 = vmatpush1.msra.mxu0 0.0
        %284 = vmatprep.subr.mxu0 0.0
        %285 = vmatpush1.msra.mxu0 0.0
        %286 = vmatprep.subr.mxu0 0.0
        %287 = vmatpush1.msra.mxu0 0.0
        %288 = vmatprep.subr.mxu0 0.0
        %289 = vmatpush1.msra.mxu0 0.0
        %290 = vmatprep.subr.mxu0 0.0
        %291 = vmatpush1.msra.mxu0 %v258
        %292 = vmatprep.subr.mxu0 0.0
        %293 = vmatpush2.msra.mxu0 0.0
        %294 = vmatprep.subr.mxu0 0.0
        %295 = vmatpush2.msra.mxu0 0.0
        %296 = vmatprep.subr.mxu0 0.0
        %297 = vmatpush2.msra.mxu0 0.0
        %298 = vmatprep.subr.mxu0 0.0
        %299 = vmatpush2.msra.mxu0 0.0
        %300 = vmatprep.subr.mxu0 0.0
        %301 = vmatpush2.msra.mxu0 0.0
        %302 = vmatprep.subr.mxu0 0.0
        %303 = vmatpush2.msra.mxu0 0.0
        %304 = vmatprep.subr.mxu0 0.0
        %305 = vmatpush2.msra.mxu0 0.0
        %306 = vmatprep.subr.mxu0 0.0
        %307 = vmatpush2.msra.mxu0 0.0
        %308 = vmatprep.subr.mxu0 0.0
        %309 = vmatpush2.msra.mxu0 0.0
        %310 = vmatprep.subr.mxu0 0.0
        %311 = vmatpush2.msra.mxu0 0.0
        %312 = vmatprep.subr.mxu0 0.0
        %313 = vmatpush2.msra.mxu0 0.0
        %314 = vmatprep.subr.mxu0 0.0
        %315 = vmatpush2.msra.mxu0 0.0
        %316 = vmatprep.subr.mxu0 0.0
        %317 = vmatpush2.msra.mxu0 0.0
        %318 = vmatprep.subr.mxu0 0.0
        %319 = vmatpush2.msra.mxu0 0.0
        %320 = vmatprep.subr.mxu0 0.0
        %321 = vmatpush2.msra.mxu0 0.0
        %322 = vmatprep.subr.mxu0 0.0
        %323 = vmatpush2.msra.mxu0 0.0
        %324 = vmatprep.mubr.f32.mxu0 0.0
        %325 = vmatmul.mubr.f32.gmra.mxu0 %v254
        %v326 = vpop.f32.mrf.mxu0
        %v327 = vadd.f32 0.0, %v326
        %v328 = vpop.f32.mrf.mxu0
        %329 = vdwg.mxu0
        %v330 = vadd.f32 %v224, %v327
        %s331 = scalar_lea.vmem %s1, 4
        %v332 = vld [vmem:[%s331] sm:$0xf]
        %333 = vrot.lane.b32.xlu0 %v250, 127
        %v334 = vpop.permute.xlu0 %333
        %v336 = vsel %vm252, %v332, 0
        %v338 = vsel %vm256, %v334, 0
        %340 = vmatprep.subr.mxu0 0.0
        %341 = vmatpush1.msra.mxu0 0.0
        %342 = vmatprep.subr.mxu0 0.0
        %343 = vmatpush1.msra.mxu0 0.0
        %344 = vmatprep.subr.mxu0 0.0
        %345 = vmatpush1.msra.mxu0 0.0
        %346 = vmatprep.subr.mxu0 0.0
        %347 = vmatpush1.msra.mxu0 0.0
        %348 = vmatprep.subr.mxu0 0.0
        %349 = vmatpush1.msra.mxu0 0.0
        %350 = vmatprep.subr.mxu0 0.0
        %351 = vmatpush1.msra.mxu0 0.0
        %352 = vmatprep.subr.mxu0 0.0
        %353 = vmatpush1.msra.mxu0 0.0
        %354 = vmatprep.subr.mxu0 0.0
        %355 = vmatpush1.msra.mxu0 0.0
        %356 = vmatprep.subr.mxu0 0.0
        %357 = vmatpush1.msra.mxu0 0.0
        %358 = vmatprep.subr.mxu0 0.0
        %359 = vmatpush1.msra.mxu0 0.0
        %360 = vmatprep.subr.mxu0 0.0
        %361 = vmatpush1.msra.mxu0 0.0
        %362 = vmatprep.subr.mxu0 0.0
        %363 = vmatpush1.msra.mxu0 0.0
        %364 = vmatprep.subr.mxu0 0.0
        %365 = vmatpush1.msra.mxu0 0.0
        %366 = vmatprep.subr.mxu0 0.0
        %367 = vmatpush1.msra.mxu0 0.0
        %368 = vmatprep.subr.mxu0 0.0
        %369 = vmatpush1.msra.mxu0 0.0
        %370 = vmatprep.subr.mxu0 0.0
        %371 = vmatpush1.msra.mxu0 %v338
        %372 = vmatprep.subr.mxu0 0.0
        %373 = vmatpush2.msra.mxu0 0.0
        %374 = vmatprep.subr.mxu0 0.0
        %375 = vmatpush2.msra.mxu0 0.0
        %376 = vmatprep.subr.mxu0 0.0
        %377 = vmatpush2.msra.mxu0 0.0
        %378 = vmatprep.subr.mxu0 0.0
        %379 = vmatpush2.msra.mxu0 0.0
        %380 = vmatprep.subr.mxu0 0.0
        %381 = vmatpush2.msra.mxu0 0.0
        %382 = vmatprep.subr.mxu0 0.0
        %383 = vmatpush2.msra.mxu0 0.0
        %384 = vmatprep.subr.mxu0 0.0
        %385 = vmatpush2.msra.mxu0 0.0
        %386 = vmatprep.subr.mxu0 0.0
        %387 = vmatpush2.msra.mxu0 0.0
        %388 = vmatprep.subr.mxu0 0.0
        %389 = vmatpush2.msra.mxu0 0.0
        %390 = vmatprep.subr.mxu0 0.0
        %391 = vmatpush2.msra.mxu0 0.0
        %392 = vmatprep.subr.mxu0 0.0
        %393 = vmatpush2.msra.mxu0 0.0
        %394 = vmatprep.subr.mxu0 0.0
        %395 = vmatpush2.msra.mxu0 0.0
        %396 = vmatprep.subr.mxu0 0.0
        %397 = vmatpush2.msra.mxu0 0.0
        %398 = vmatprep.subr.mxu0 0.0
        %399 = vmatpush2.msra.mxu0 0.0
        %400 = vmatprep.subr.mxu0 0.0
        %401 = vmatpush2.msra.mxu0 0.0
        %402 = vmatprep.subr.mxu0 0.0
        %403 = vmatpush2.msra.mxu0 0.0
        %404 = vmatprep.mubr.f32.mxu0 0.0
        %405 = vmatmul.mubr.f32.gmra.mxu0 %v336
        %v406 = vpop.f32.mrf.mxu0
        %v407 = vadd.f32 0.0, %v406
        %v408 = vpop.f32.mrf.mxu0
        %409 = vdwg.mxu0
        %v410 = vadd.f32 %v330, %v407
        %s411 = scalar_lea.vmem %s1, 8
        %v412 = vld [vmem:[%s411] sm:$0xf]
        %413 = vrot.lane.b32.xlu0 %v250, 126
        %v414 = vpop.permute.xlu0 %413
        %v416 = vsel %vm252, %v412, 0
        %v418 = vsel %vm256, %v414, 0
        %420 = vmatprep.subr.mxu0 0.0
        %421 = vmatpush1.msra.mxu0 0.0
        %422 = vmatprep.subr.mxu0 0.0
        %423 = vmatpush1.msra.mxu0 0.0
        %424 = vmatprep.subr.mxu0 0.0
        %425 = vmatpush1.msra.mxu0 0.0
        %426 = vmatprep.subr.mxu0 0.0
        %427 = vmatpush1.msra.mxu0 0.0
        %428 = vmatprep.subr.mxu0 0.0
        %429 = vmatpush1.msra.mxu0 0.0
        %430 = vmatprep.subr.mxu0 0.0
        %431 = vmatpush1.msra.mxu0 0.0
        %432 = vmatprep.subr.mxu0 0.0
        %433 = vmatpush1.msra.mxu0 0.0
        %434 = vmatprep.subr.mxu0 0.0
        %435 = vmatpush1.msra.mxu0 0.0
        %436 = vmatprep.subr.mxu0 0.0
        %437 = vmatpush1.msra.mxu0 0.0
        %438 = vmatprep.subr.mxu0 0.0
        %439 = vmatpush1.msra.mxu0 0.0
        %440 = vmatprep.subr.mxu0 0.0
        %441 = vmatpush1.msra.mxu0 0.0
        %442 = vmatprep.subr.mxu0 0.0
        %443 = vmatpush1.msra.mxu0 0.0
        %444 = vmatprep.subr.mxu0 0.0
        %445 = vmatpush1.msra.mxu0 0.0
        %446 = vmatprep.subr.mxu0 0.0
        %447 = vmatpush1.msra.mxu0 0.0
        %448 = vmatprep.subr.mxu0 0.0
        %449 = vmatpush1.msra.mxu0 0.0
        %450 = vmatprep.subr.mxu0 0.0
        %451 = vmatpush1.msra.mxu0 %v418
        %452 = vmatprep.subr.mxu0 0.0
        %453 = vmatpush2.msra.mxu0 0.0
        %454 = vmatprep.subr.mxu0 0.0
        %455 = vmatpush2.msra.mxu0 0.0
        %456 = vmatprep.subr.mxu0 0.0
        %457 = vmatpush2.msra.mxu0 0.0
        %458 = vmatprep.subr.mxu0 0.0
        %459 = vmatpush2.msra.mxu0 0.0
        %460 = vmatprep.subr.mxu0 0.0
        %461 = vmatpush2.msra.mxu0 0.0
        %462 = vmatprep.subr.mxu0 0.0
        %463 = vmatpush2.msra.mxu0 0.0
        %464 = vmatprep.subr.mxu0 0.0
        %465 = vmatpush2.msra.mxu0 0.0
        %466 = vmatprep.subr.mxu0 0.0
        %467 = vmatpush2.msra.mxu0 0.0
        %468 = vmatprep.subr.mxu0 0.0
        %469 = vmatpush2.msra.mxu0 0.0
        %470 = vmatprep.subr.mxu0 0.0
        %471 = vmatpush2.msra.mxu0 0.0
        %472 = vmatprep.subr.mxu0 0.0
        %473 = vmatpush2.msra.mxu0 0.0
        %474 = vmatprep.subr.mxu0 0.0
        %475 = vmatpush2.msra.mxu0 0.0
        %476 = vmatprep.subr.mxu0 0.0
        %477 = vmatpush2.msra.mxu0 0.0
        %478 = vmatprep.subr.mxu0 0.0
        %479 = vmatpush2.msra.mxu0 0.0
        %480 = vmatprep.subr.mxu0 0.0
        %481 = vmatpush2.msra.mxu0 0.0
        %482 = vmatprep.subr.mxu0 0.0
        %483 = vmatpush2.msra.mxu0 0.0
        %484 = vmatprep.mubr.f32.mxu0 0.0
        %485 = vmatmul.mubr.f32.gmra.mxu0 %v416
        %v486 = vpop.f32.mrf.mxu0
        %v487 = vadd.f32 0.0, %v486
        %v488 = vpop.f32.mrf.mxu0
        %489 = vdwg.mxu0
        %v490 = vadd.f32 %v410, %v487
        %v491 = vtanh.pop %v490
        %v493 = vsel %vm252, %v226, 0
        %v496 = vsel %vm252, %v227, 0
        %v499 = vsel %vm256, %v491, 0
        %501 = vmatprep.subr.mxu0 0.0
        %502 = vmatpush1.msra.mxu0 0.0
        %503 = vmatprep.subr.mxu0 0.0
        %504 = vmatpush1.msra.mxu0 0.0
        %505 = vmatprep.subr.mxu0 0.0
        %506 = vmatpush1.msra.mxu0 0.0
        %507 = vmatprep.subr.mxu0 0.0
        %508 = vmatpush1.msra.mxu0 0.0
        %509 = vmatprep.subr.mxu0 0.0
        %510 = vmatpush1.msra.mxu0 0.0
        %511 = vmatprep.subr.mxu0 0.0
        %512 = vmatpush1.msra.mxu0 0.0
        %513 = vmatprep.subr.mxu0 0.0
        %514 = vmatpush1.msra.mxu0 0.0
        %515 = vmatprep.subr.mxu0 0.0
        %516 = vmatpush1.msra.mxu0 0.0
        %517 = vmatprep.subr.mxu0 0.0
        %518 = vmatpush1.msra.mxu0 0.0
        %519 = vmatprep.subr.mxu0 0.0
        %520 = vmatpush1.msra.mxu0 0.0
        %521 = vmatprep.subr.mxu0 0.0
        %522 = vmatpush1.msra.mxu0 0.0
        %523 = vmatprep.subr.mxu0 0.0
        %524 = vmatpush1.msra.mxu0 0.0
        %525 = vmatprep.subr.mxu0 0.0
        %526 = vmatpush1.msra.mxu0 0.0
        %527 = vmatprep.subr.mxu0 0.0
        %528 = vmatpush1.msra.mxu0 0.0
        %529 = vmatprep.subr.mxu0 0.0
        %530 = vmatpush1.msra.mxu0 0.0
        %531 = vmatprep.subr.mxu0 0.0
        %532 = vmatpush1.msra.mxu0 %v499
        %533 = vmatprep.subr.mxu0 0.0
        %534 = vmatpush2.msra.mxu0 0.0
        %535 = vmatprep.subr.mxu0 0.0
        %536 = vmatpush2.msra.mxu0 0.0
        %537 = vmatprep.subr.mxu0 0.0
        %538 = vmatpush2.msra.mxu0 0.0
        %539 = vmatprep.subr.mxu0 0.0
        %540 = vmatpush2.msra.mxu0 0.0
        %541 = vmatprep.subr.mxu0 0.0
        %542 = vmatpush2.msra.mxu0 0.0
        %543 = vmatprep.subr.mxu0 0.0
        %544 = vmatpush2.msra.mxu0 0.0
        %545 = vmatprep.subr.mxu0 0.0
        %546 = vmatpush2.msra.mxu0 0.0
        %547 = vmatprep.subr.mxu0 0.0
        %548 = vmatpush2.msra.mxu0 0.0
        %549 = vmatprep.subr.mxu0 0.0
        %550 = vmatpush2.msra.mxu0 0.0
        %551 = vmatprep.subr.mxu0 0.0
        %552 = vmatpush2.msra.mxu0 0.0
        %553 = vmatprep.subr.mxu0 0.0
        %554 = vmatpush2.msra.mxu0 0.0
        %555 = vmatprep.subr.mxu0 0.0
        %556 = vmatpush2.msra.mxu0 0.0
        %557 = vmatprep.subr.mxu0 0.0
        %558 = vmatpush2.msra.mxu0 0.0
        %559 = vmatprep.subr.mxu0 0.0
        %560 = vmatpush2.msra.mxu0 0.0
        %561 = vmatprep.subr.mxu0 0.0
        %562 = vmatpush2.msra.mxu0 0.0
        %563 = vmatprep.subr.mxu0 0.0
        %564 = vmatpush2.msra.mxu0 0.0
        %565 = vmatprep.mubr.f32.mxu0 0.0
        %566 = vmatmul.mubr.f32.gmra.mxu0 %v493
        %v567 = vpop.f32.mrf.mxu0
        %v568 = vadd.f32 0.0, %v567
        %v569 = vpop.f32.mrf.mxu0
        %570 = vmatprep.mubr.f32.mxu0 0.0
        %571 = vmatmul.mubr.f32.gmra.mxu0 %v496
        %v572 = vpop.f32.mrf.mxu0
        %v573 = vadd.f32 0.0, %v572
        %v574 = vpop.f32.mrf.mxu0
        %575 = vdwg.mxu0
        %vm576 = vcmask 130048
        %v578 = vsel %vm576, %v573, 0
        %580 = vmatprep.subr.mxu0 0.0
        %581 = vmatpush1.msra.mxu0 0.0
        %582 = vmatprep.subr.mxu0 0.0
        %583 = vmatpush1.msra.mxu0 0.0
        %584 = vmatprep.subr.mxu0 0.0
        %585 = vmatpush1.msra.mxu0 0.0
        %586 = vmatprep.subr.mxu0 0.0
        %587 = vmatpush1.msra.mxu0 0.0
        %588 = vmatprep.subr.mxu0 0.0
        %589 = vmatpush1.msra.mxu0 0.0
        %590 = vmatprep.subr.mxu0 0.0
        %591 = vmatpush1.msra.mxu0 0.0
        %592 = vmatprep.subr.mxu0 0.0
        %593 = vmatpush1.msra.mxu0 0.0
        %594 = vmatprep.subr.mxu0 0.0
        %595 = vmatpush1.msra.mxu0 0.0
        %596 = vmatprep.subr.mxu0 0.0
        %597 = vmatpush1.msra.mxu0 0.0
        %598 = vmatprep.subr.mxu0 0.0
        %599 = vmatpush1.msra.mxu0 0.0
        %600 = vmatprep.subr.mxu0 0.0
        %601 = vmatpush1.msra.mxu0 0.0
        %602 = vmatprep.subr.mxu0 0.0
        %603 = vmatpush1.msra.mxu0 0.0
        %604 = vmatprep.subr.mxu0 0.0
        %605 = vmatpush1.msra.mxu0 0.0
        %606 = vmatprep.subr.mxu0 0.0
        %607 = vmatpush1.msra.mxu0 0.0
        %608 = vmatprep.subr.mxu0 0.0
        %609 = vmatpush1.msra.mxu0 %v249
        %610 = vmatprep.subr.mxu0 0.0
        %611 = vmatpush1.msra.mxu0 %v248
        %612 = vmatprep.subr.mxu0 0.0
        %613 = vmatpush2.msra.mxu0 0.0
        %614 = vmatprep.subr.mxu0 0.0
        %615 = vmatpush2.msra.mxu0 0.0
        %616 = vmatprep.subr.mxu0 0.0
        %617 = vmatpush2.msra.mxu0 0.0
        %618 = vmatprep.subr.mxu0 0.0
        %619 = vmatpush2.msra.mxu0 0.0
        %620 = vmatprep.subr.mxu0 0.0
        %621 = vmatpush2.msra.mxu0 0.0
        %622 = vmatprep.subr.mxu0 0.0
        %623 = vmatpush2.msra.mxu0 0.0
        %624 = vmatprep.subr.mxu0 0.0
        %625 = vmatpush2.msra.mxu0 0.0
        %626 = vmatprep.subr.mxu0 0.0
        %627 = vmatpush2.msra.mxu0 0.0
        %628 = vmatprep.subr.mxu0 0.0
        %629 = vmatpush2.msra.mxu0 0.0
        %630 = vmatprep.subr.mxu0 0.0
        %631 = vmatpush2.msra.mxu0 0.0
        %632 = vmatprep.subr.mxu0 0.0
        %633 = vmatpush2.msra.mxu0 0.0
        %634 = vmatprep.subr.mxu0 0.0
        %635 = vmatpush2.msra.mxu0 0.0
        %636 = vmatprep.subr.mxu0 0.0
        %637 = vmatpush2.msra.mxu0 0.0
        %638 = vmatprep.subr.mxu0 0.0
        %639 = vmatpush2.msra.mxu0 0.0
        %640 = vmatprep.subr.mxu0 0.0
        %641 = vmatpush2.msra.mxu0 0.0
        %642 = vmatprep.subr.mxu0 0.0
        %643 = vmatpush2.msra.mxu0 0.0
        %644 = vmatprep.mubr.f32.mxu0 0.0
        %645 = vmatmul.mubr.f32.gmra.mxu0 %v578
        %v646 = vpop.f32.mrf.mxu0
        %v647 = vadd.f32 0.0, %v646
        %v648 = vpop.f32.mrf.mxu0
        %649 = vdwg.mxu0
        %v651 = vsel %vm576, %v568, 0
        %653 = vmatprep.subr.mxu0 0.0
        %654 = vmatpush1.msra.mxu0 0.0
        %655 = vmatprep.subr.mxu0 0.0
        %656 = vmatpush1.msra.mxu0 0.0
        %657 = vmatprep.subr.mxu0 0.0
        %658 = vmatpush1.msra.mxu0 0.0
        %659 = vmatprep.subr.mxu0 0.0
        %660 = vmatpush1.msra.mxu0 0.0
        %661 = vmatprep.subr.mxu0 0.0
        %662 = vmatpush1.msra.mxu0 0.0
        %663 = vmatprep.subr.mxu0 0.0
        %664 = vmatpush1.msra.mxu0 0.0
        %665 = vmatprep.subr.mxu0 0.0
        %666 = vmatpush1.msra.mxu0 0.0
        %667 = vmatprep.subr.mxu0 0.0
        %668 = vmatpush1.msra.mxu0 0.0
        %669 = vmatprep.subr.mxu0 0.0
        %670 = vmatpush1.msra.mxu0 0.0
        %671 = vmatprep.subr.mxu0 0.0
        %672 = vmatpush1.msra.mxu0 0.0
        %673 = vmatprep.subr.mxu0 0.0
        %674 = vmatpush1.msra.mxu0 0.0
        %675 = vmatprep.subr.mxu0 0.0
        %676 = vmatpush1.msra.mxu0 0.0
        %677 = vmatprep.subr.mxu0 0.0
        %678 = vmatpush1.msra.mxu0 0.0
        %679 = vmatprep.subr.mxu0 0.0
        %680 = vmatpush1.msra.mxu0 0.0
        %681 = vmatprep.subr.mxu0 0.0
        %682 = vmatpush1.msra.mxu0 %v241
        %683 = vmatprep.subr.mxu0 0.0
        %684 = vmatpush1.msra.mxu0 %v240
        %685 = vmatprep.subr.mxu0 0.0
        %686 = vmatpush2.msra.mxu0 0.0
        %687 = vmatprep.subr.mxu0 0.0
        %688 = vmatpush2.msra.mxu0 0.0
        %689 = vmatprep.subr.mxu0 0.0
        %690 = vmatpush2.msra.mxu0 0.0
        %691 = vmatprep.subr.mxu0 0.0
        %692 = vmatpush2.msra.mxu0 0.0
        %693 = vmatprep.subr.mxu0 0.0
        %694 = vmatpush2.msra.mxu0 0.0
        %695 = vmatprep.subr.mxu0 0.0
        %696 = vmatpush2.msra.mxu0 0.0
        %697 = vmatprep.subr.mxu0 0.0
        %698 = vmatpush2.msra.mxu0 0.0
        %699 = vmatprep.subr.mxu0 0.0
        %700 = vmatpush2.msra.mxu0 0.0
        %701 = vmatprep.subr.mxu0 0.0
        %702 = vmatpush2.msra.mxu0 0.0
        %703 = vmatprep.subr.mxu0 0.0
        %704 = vmatpush2.msra.mxu0 0.0
        %705 = vmatprep.subr.mxu0 0.0
        %706 = vmatpush2.msra.mxu0 0.0
        %707 = vmatprep.subr.mxu0 0.0
        %708 = vmatpush2.msra.mxu0 0.0
        %709 = vmatprep.subr.mxu0 0.0
        %710 = vmatpush2.msra.mxu0 0.0
        %711 = vmatprep.subr.mxu0 0.0
        %712 = vmatpush2.msra.mxu0 0.0
        %713 = vmatprep.subr.mxu0 0.0
        %714 = vmatpush2.msra.mxu0 0.0
        %715 = vmatprep.subr.mxu0 0.0
        %716 = vmatpush2.msra.mxu0 0.0
        %717 = vmatprep.mubr.f32.mxu0 0.0
        %718 = vmatmul.mubr.f32.gmra.mxu0 %v651
        %v719 = vpop.f32.mrf.mxu0
        %v720 = vadd.f32 %v647, %v719
        %v721 = vpop.f32.mrf.mxu0
        %722 = vdwg.mxu0
        %724 = vset.pattern.permute.xlu0 0
        %725 = vperm.xlu0 %724, %v228
        %v726 = vpop.permute.xlu0 %725
        %v728 = vadd.f32 %v720, %v726
        %v729 = vtanh.pop %v728
        %vm730 = vcmask 261120
        %731 = vst.msk [vmem:[%s215] sm:$0xff] %vm730, %v729
        %s732 = sand.u32 %s137, 1
        %s733 = scalar_lea.sflag [#allocation3], %s732
        %s734 = sand.u32 %s137, 1
        %s735 = smul.addr %s734, 8
        %s736 = scalar_lea.vmem [#allocation2], %s735
        // Predicated region
        $region41: #{tpu_custom_call.1} parent=39 // pred_check
          %p737 = pneg %p147
        $region42: #{tpu_custom_call.1} parent=39 // pred_check_branch
          %739 = sbr.rel (%p737) target = $region44
        $region43: #{tpu_custom_call.1} parent=39 // pred_region
          %s741 = ssub.s32 128, 128
          %742 = vsyncadd %s733, %s741
          %s743 = smul.addr %s19, 128
          %s744 = scalar_lea.hbm %s5, %s743
          %s746 = sshll.u32 %s736, 4
          %s747 = int_to_ptr.vmem [resolvable:$true] %s746
          %749 = dma.vmem_to_hbm [thread:$0]  %s747, 128, %s744, %s733
        $region44: #{tpu_custom_call.1} parent=39 // pred_fallthru
          _
      $region40: #{tpu_custom_call.1} parent=5 // pred_fallthru
        _
      %p750 = scmp.le.s32.totalorder 2, %s14
      // Predicated region
      $region45: #{tpu_custom_call.1} parent=5 // pred_check
        %p751 = pneg %p750
      $region46: #{tpu_custom_call.1} parent=5 // pred_check_branch
        %753 = sbr.rel (%p751) target = $region48
      $region47: #{tpu_custom_call.1} parent=5 // pred_region
        %s754 = ssub.s32 %s14, 2
        // Predicated region
        $region49: #{tpu_custom_call.1} parent=47 // pred_check
          %p755 = pneg %p153
        $region50: #{tpu_custom_call.1} parent=47 // pred_check_branch
          %757 = sbr.rel (%p755) target = $region52
        $region51: #{tpu_custom_call.1} parent=47 // pred_region
          %s758 = sand.u32 %s138, 1
          %s759 = scalar_lea.sflag [#allocation3], %s758
          %s760 = sand.u32 %s138, 1
          %s761 = smul.addr %s760, 8
          %s762 = scalar_lea.vmem [#allocation2], %s761
          %763 = dma.done %s759, 128
        $region52: #{tpu_custom_call.1} parent=47 // pred_fallthru
          _
      $region48: #{tpu_custom_call.1} parent=5 // pred_fallthru
        _
    $region6: #{tpu_custom_call.1} parent=1 // loop_footer
      %s18 = sadd.s32 1, %s14
    $region7: #{tpu_custom_call.1} parent=1 // loop_footer_branch
      %13 = sbr.rel target = $region3
    $region8: #{tpu_custom_call.1} parent=1 // loop_exit
      _
    %764 = vsyncpa [#allocation3], 1
    %s765 = scalar_lea.sflag [#allocation3], 1
    %766 = vsyncpa %s765, 1

</llo_original>
